<compile_context>
chip_gen: v5e
topology: v5e:2x2
jax: 0.10.0
libtpu: 0.0.40
codegen_flags: <defaults>
</compile_context>

<pallas_src>
import jax
import jax.numpy as jnp
from jax.experimental import pallas as pl
from jax.experimental.pallas import tpu as pltpu

_LANES = 128      # vreg lane width
_SUBLANES = 8     # f32 sublane tile


def _copy_kernel(x_ref, o_ref):
    # Pure pass-through of one lane-dense VMEM tile.
    o_ref[...] = x_ref[...]


def _pick_block_rows(rows):
    # ~2 MiB f32 per block: 128 lanes * 4 B = 512 B/row -> 4096 rows.
    # Double-buffered in + aliased out stays well under v7x's 32 MiB scoped
    # VMEM default (and trivially under v5e/v6e's 128 MiB physical VMEM).
    block_rows = min(rows, 4096)
    if block_rows > _SUBLANES:
        block_rows -= block_rows % _SUBLANES  # keep sublane alignment
    return block_rows


@jax.jit
def _identity_copy(x):
    """Validation-only identity copy through VMEM (lane-dense, tiled, aliased)."""
    orig_shape = x.shape
    flat = x.reshape(-1)
    total = flat.shape[0]

    # Pad (statically) to a whole (8, 128) tile, then view as (rows, 128).
    tile = _SUBLANES * _LANES
    padded = pl.cdiv(total, tile) * tile
    if padded != total:
        flat = jnp.pad(flat, (0, padded - total))
    rows = padded // _LANES
    x2d = flat.reshape(rows, _LANES)

    block_rows = _pick_block_rows(rows)
    grid = (pl.cdiv(rows, block_rows),)

    out2d = pl.pallas_call(
        _copy_kernel,
        out_shape=jax.ShapeDtypeStruct((rows, _LANES), x.dtype),
        grid_spec=pl.GridSpec(
            grid=grid,
            in_specs=[pl.BlockSpec((block_rows, _LANES), lambda i: (i, 0))],
            out_specs=pl.BlockSpec((block_rows, _LANES), lambda i: (i, 0)),
        ),
        # Output aliases the (flattened) input buffer: no second HBM
        # allocation; identity write keeps values bit-exact.
        input_output_aliases={0: 0},
        compiler_params=pltpu.CompilerParams(
            # Parallel so v7x's 2 TensorCores shard the grid; neutral on
            # single-TC v5e/v6e.
            dimension_semantics=("parallel",),
            vmem_limit_bytes=32 * 1024 * 1024,
        ),
    )(x2d)

    out_flat = out2d.reshape(-1)
    if padded != total:
        out_flat = out_flat[:total]
    return out_flat.reshape(orig_shape)


def base_model_forward(*inputs):
    """Faithful Pallas equivalent of BaseModel.forward.

    The PyTorch forward body is `pass`, so the translation performs no
    computation and returns None.  No pallas_call is issued on this path
    (zero HBM traffic) — per the performance review, eliminating the
    superfluous copy is the highest-value optimization.
    """
    return None


if __name__ == "__main__":
    key = jax.random.PRNGKey(0)
    # Small NCHW input consistent with a typical conv-style module signature.
    x = jax.random.normal(key, (2, 4, 16, 16), dtype=jnp.float32)

    # Faithful forward: returns None, exactly like the PyTorch stub.
    result = base_model_forward(x)
    assert result is None

    # Validation-only kernel run: optimized identity copy must reproduce the
    # input bit-exactly.
    copied = _identity_copy(x)
    copied = jax.block_until_ready(copied)
    assert copied.shape == x.shape and copied.dtype == x.dtype
    assert bool(jnp.array_equal(copied, x))

    print("KERNEL_OK")
</pallas_src>

<mosaic_0001>
module attributes {stable_mosaic.version = 11 : i64} {
  func.func @_copy_kernel(%arg0: i32, %arg1: memref<16x128xf32, #tpu.memory_space<vmem>>, %arg2: memref<16x128xf32, #tpu.memory_space<vmem>>) attributes {dimension_semantics = [#tpu.dimension_semantics<parallel>], iteration_bounds = array<i64: 1>, scalar_prefetch = 0 : i64, scratch_operands = 0 : i64, tpu.core_type = #tpu.core_type<tc>, window_params = [{transform_indices = @transform_0, window_bounds = array<i64: 16, 128>}, {transform_indices = @transform_1, window_bounds = array<i64: 16, 128>}]} {
    %c0 = arith.constant 0 : index
    %c0_0 = arith.constant 0 : index
    %0 = vector.load %arg1[%c0, %c0_0] : memref<16x128xf32, #tpu.memory_space<vmem>>, vector<16x128xf32>
    %c0_1 = arith.constant 0 : index
    %c0_2 = arith.constant 0 : index
    %1 = vector.load %arg2[%c0_1, %c0_2] : memref<16x128xf32, #tpu.memory_space<vmem>>, vector<16x128xf32>
    tpu.vector_store %arg2[%c0_1, %c0_2], %0 {strides = array<i32>} : memref<16x128xf32, #tpu.memory_space<vmem>>, vector<16x128xf32>,
    return
  }
  func.func @transform_0(%arg0: i32) -> (i32, i32) {
    %c0_i32 = arith.constant 0 : i32
    %c0_i32_0 = arith.constant 0 : i32
    return %arg0, %c0_i32 : i32, i32
  }
  func.func @transform_1(%arg0: i32) -> (i32, i32) {
    %c0_i32 = arith.constant 0 : i32
    %c0_i32_0 = arith.constant 0 : i32
    return %arg0, %c0_i32 : i32, i32
  }
}

</mosaic_0001>

<llo_original>
// kernel: _identity_copy.1
$region0: #{_identity_copy.1}
  #allocation0 [shape = 'u32[]', space=smem, size = 0x4, offset = 0x4, fixed_abs, tag = 'smem constant byte address 0x4 - core index']
  #allocation1 [shape = 'u32[72,128]{1,0:T(1,128)}', space=vmem, size = 0x9000, scoped, tag = 'internal scratch']
  %s0 = inlined_call_operand.vmem [shape: f32[16,128], index: 0, kind: input, shape index: {}, may-alias: {0,1}]
  %s1 = inlined_call_operand.vmem [shape: f32[16,128], index: 1, kind: output, shape index: {}, may-alias: {0,1}]
  %s2 = sld [smem:[#allocation0]]
  $region14: #{_identity_copy.1} parent=0
    _
  %s4 = ssub.s32 1, %s2
  %s5 = scalar_select 0, %s4, %s2
  // Predicated region
  $region2: #{_identity_copy.1} parent=0 // pred_check
    _
  $region3: #{_identity_copy.1} parent=0 // pred_check_branch
    %7 = sbr.rel (0) target = $region5
  $region4: #{_identity_copy.1} parent=0 // pred_region
    _
  $region5: #{_identity_copy.1} parent=0 // pred_fallthru
    _
  %v8 = vld [vmem:[%s0] sm:$0xff]
  %v9 = vld [vmem:[%s0 + $0x8] sm:$0xff]
  %10 = vst [vmem:[%s1] sm:$0xff] %v8
  %11 = vst [vmem:[%s1 + $0x8] sm:$0xff] %v9
  // Predicated region
  $region6: #{_identity_copy.1} parent=0 // pred_check
    _
  $region7: #{_identity_copy.1} parent=0 // pred_check_branch
    %13 = sbr.rel (0) target = $region9
  $region8: #{_identity_copy.1} parent=0 // pred_region
    _
  $region9: #{_identity_copy.1} parent=0 // pred_fallthru
    _
  // Predicated region
  $region10: #{_identity_copy.1} parent=0 // pred_check
    _
  $region11: #{_identity_copy.1} parent=0 // pred_check_branch
    %15 = sbr.rel (0) target = $region13
  $region12: #{_identity_copy.1} parent=0 // pred_region
    _
  $region13: #{_identity_copy.1} parent=0 // pred_fallthru
    _

</llo_original>
